<compile_context>
chip_gen: v5e
topology: v5e:2x2
jax: 0.10.0
libtpu: 0.0.40
codegen_flags: <defaults>
</compile_context>

<pallas_src>
import functools

import jax
import jax.numpy as jnp
from jax import lax
from jax.experimental import pallas as pl
from jax.experimental.pallas import tpu as pltpu

_NEG_INIT = -1e30                      # finite running-max init (avoids NaN)
_ATTN_SLAB_BUDGET = 8 * 1024 * 1024    # bytes for the kv-resident f32 attn block


def _round_up(x, m):
    return ((x + m - 1) // m) * m


def _sdpa_kernel(q_ref, k_ref, v_ref, mask_ref, attn_ref, out_ref,
                 m_sc, l_sc, acc_sc, *, inv_scale, tkv):
    ki = pl.program_id(2)

    @pl.when(ki == 0)
    def _init():
        m_sc[...] = jnp.full(m_sc.shape, _NEG_INIT, dtype=jnp.float32)
        l_sc[...] = jnp.zeros(l_sc.shape, dtype=jnp.float32)
        acc_sc[...] = jnp.zeros(acc_sc.shape, dtype=jnp.float32)

    q = q_ref[0]          # (TQ,  d_k) bf16
    k = k_ref[0]          # (TKV, d_k) bf16
    v = v_ref[0]          # (TKV, d_v) bf16
    msk = mask_ref[0]     # (TQ, TKV)  int8, nonzero => masked out

    # scores = (q @ k^T) * (1/scale): contract the last dim of both operands
    # directly on the MXU (no k.T transpose), accumulate in f32.
    s = lax.dot_general(q, k, (((1,), (1,)), ((), ())),
                        preferred_element_type=jnp.float32) * inv_scale
    s = jnp.where(msk != 0, -jnp.inf, s)

    # Stash raw (masked, scaled) scores into the kv-resident attn output block;
    # normalized once on the last kv step.
    col = pl.multiple_of(ki * tkv, tkv)
    attn_ref[0, :, pl.ds(col, tkv)] = s

    # Online softmax update.
    m_new = jnp.maximum(m_sc[...], jnp.max(s, axis=-1, keepdims=True))
    alpha = jnp.exp(m_sc[...] - m_new)
    p = jnp.exp(s - m_new)
    l_sc[...] = alpha * l_sc[...] + jnp.sum(p, axis=-1, keepdims=True)
    acc_sc[...] = alpha * acc_sc[...] + jnp.dot(
        p.astype(v.dtype), v, preferred_element_type=jnp.float32)
    m_sc[...] = m_new

    @pl.when(ki == pl.num_programs(2) - 1)
    def _finalize():
        inv_l = pl.reciprocal(l_sc[...], approx=False)  # exact: attn is an output
        attn_ref[0] = jnp.exp(attn_ref[0] - m_sc[...]) * inv_l
        out_ref[0] = (acc_sc[...] * inv_l).astype(out_ref.dtype)


def scaled_dot_product_attention(q, k, v, mask, scale, *, tq_max=128, tkv_max=512):
    """Returns (attn [B, len_q, len_kv] f32, output [B, len_q, d_v] f32)."""
    B, len_q, d_k = q.shape
    _, len_kv, d_v = v.shape

    # Tile sizes: lane-dense (multiple of 128) on the kv axis, sublane-aligned
    # on the q axis.
    tkv = min(tkv_max, _round_up(len_kv, 128))
    lkv_p = _round_up(len_kv, tkv)

    tq = min(tq_max, _round_up(len_q, 8))
    # The attn output block is kv-resident in VMEM; keep its f32 slab within
    # budget for long kv by shrinking the q tile (never below 8 sublanes).
    tq = max(8, min(tq, (_ATTN_SLAB_BUDGET // (lkv_p * 4)) // 8 * 8))
    lq_p = _round_up(len_q, tq)

    # bf16 MXU inputs (f32 accumulation in-kernel) + int8 mask: fewer DMA bytes.
    q_p = jnp.pad(q, ((0, 0), (0, lq_p - len_q), (0, 0))).astype(jnp.bfloat16)
    k_p = jnp.pad(k, ((0, 0), (0, lkv_p - len_kv), (0, 0))).astype(jnp.bfloat16)
    v_p = jnp.pad(v, ((0, 0), (0, lkv_p - len_kv), (0, 0))).astype(jnp.bfloat16)
    mask_p = jnp.pad(mask.astype(jnp.int8),
                     ((0, 0), (0, lq_p - len_q), (0, 0)), constant_values=0)
    mask_p = jnp.pad(mask_p, ((0, 0), (0, 0), (0, lkv_p - len_kv)),
                     constant_values=1)  # padded kv columns are masked out

    grid = (B, lq_p // tq, lkv_p // tkv)
    kernel = functools.partial(_sdpa_kernel,
                               inv_scale=1.0 / float(scale), tkv=tkv)

    attn_p, out_p = pl.pallas_call(
        kernel,
        out_shape=(
            jax.ShapeDtypeStruct((B, lq_p, lkv_p), jnp.float32),
            jax.ShapeDtypeStruct((B, lq_p, d_v), jnp.float32),
        ),
        grid_spec=pltpu.PrefetchScalarGridSpec(
            num_scalar_prefetch=0,
            grid=grid,
            in_specs=[
                pl.BlockSpec((1, tq, d_k), lambda b, qi, ki: (b, qi, 0)),
                pl.BlockSpec((1, tkv, d_k), lambda b, qi, ki: (b, ki, 0)),
                pl.BlockSpec((1, tkv, d_v), lambda b, qi, ki: (b, ki, 0)),
                pl.BlockSpec((1, tq, tkv), lambda b, qi, ki: (b, qi, ki)),
            ],
            out_specs=[
                pl.BlockSpec((1, tq, lkv_p), lambda b, qi, ki: (b, qi, 0)),
                pl.BlockSpec((1, tq, d_v), lambda b, qi, ki: (b, qi, 0)),
            ],
            scratch_shapes=[
                pltpu.VMEM((tq, 1), jnp.float32),    # running max m
                pltpu.VMEM((tq, 1), jnp.float32),    # running denom l
                pltpu.VMEM((tq, d_v), jnp.float32),  # output accumulator
            ],
        ),
        compiler_params=pltpu.CompilerParams(
            dimension_semantics=("parallel", "parallel", "arbitrary"),
            vmem_limit_bytes=32 * 1024 * 1024,
        ),
    )(q_p, k_p, v_p, mask_p)

    return attn_p[:, :len_q, :len_kv], out_p[:, :len_q, :]


if __name__ == "__main__":
    # Shapes consistent with the reference script.
    batch_size = 2
    len_q = 5
    len_kv = 10
    d_model = 512
    scale = float(jnp.sqrt(jnp.float32(d_model)))

    key = jax.random.PRNGKey(0)
    kq, kk, kv_ = jax.random.split(key, 3)
    q = jax.random.normal(kq, (batch_size, len_q, d_model), dtype=jnp.float32)
    k = jax.random.normal(kk, (batch_size, len_kv, d_model), dtype=jnp.float32)
    v = jax.random.normal(kv_, (batch_size, len_kv, d_model), dtype=jnp.float32)
    # mask = torch.zeros(...).bool() -> all False (nothing masked)
    mask = jnp.zeros((batch_size, len_q, len_kv), dtype=jnp.bool_)

    attn, out = scaled_dot_product_attention(q, k, v, mask, scale)
    jax.block_until_ready((attn, out))

    # Plain-JAX f32 reference.  The kernel feeds the MXU in bf16 (f32 accum),
    # so tolerances account for bf16 input rounding.
    scores_ref = jnp.einsum("bqd,bkd->bqk", q, k) / scale
    scores_ref = jnp.where(mask, -jnp.inf, scores_ref)
    attn_ref = jax.nn.softmax(scores_ref, axis=-1)
    out_ref = jnp.einsum("bqk,bkd->bqd", attn_ref, v)

    assert attn.shape == (batch_size, len_q, len_kv)
    assert out.shape == (batch_size, len_q, d_model)
    assert jnp.allclose(attn, attn_ref, atol=2e-2, rtol=2e-2)
    assert jnp.allclose(out, out_ref, atol=5e-2, rtol=2e-2)

    print("KERNEL_OK")
</pallas_src>

<mosaic_0001>
module attributes {stable_mosaic.version = 11 : i64} {
  func.func @_sdpa_kernel(%arg0: i32, %arg1: i32, %arg2: i32, %arg3: memref<1x8x512xbf16, #tpu.memory_space<vmem>>, %arg4: memref<1x128x512xbf16, #tpu.memory_space<vmem>>, %arg5: memref<1x128x512xbf16, #tpu.memory_space<vmem>>, %arg6: memref<1x8x128xi8, #tpu.memory_space<vmem>>, %arg7: memref<1x8x128xf32, #tpu.memory_space<vmem>>, %arg8: memref<1x8x512xf32, #tpu.memory_space<vmem>>, %arg9: memref<8x1xf32, #tpu.memory_space<vmem>>, %arg10: memref<8x1xf32, #tpu.memory_space<vmem>>, %arg11: memref<8x512xf32, #tpu.memory_space<vmem>>) attributes {dimension_semantics = [#tpu.dimension_semantics<parallel>, #tpu.dimension_semantics<parallel>, #tpu.dimension_semantics<arbitrary>], iteration_bounds = array<i64: 2, 1, 1>, scalar_prefetch = 0 : i64, scratch_operands = 3 : i64, tpu.core_type = #tpu.core_type<tc>, window_params = [{transform_indices = @transform_0, window_bounds = array<i64: 1, 8, 512>}, {transform_indices = @transform_1, window_bounds = array<i64: 1, 128, 512>}, {transform_indices = @transform_2, window_bounds = array<i64: 1, 128, 512>}, {transform_indices = @transform_3, window_bounds = array<i64: 1, 8, 128>}, {transform_indices = @transform_4, window_bounds = array<i64: 1, 8, 128>}, {transform_indices = @transform_5, window_bounds = array<i64: 1, 8, 512>}]} {
    %c0_i32 = arith.constant 0 : i32
    %0 = arith.cmpi eq, %arg2, %c0_i32 : i32
    %1 = arith.extui %0 : i1 to i32
    %c0_i32_0 = arith.constant 0 : i32
    %2 = arith.cmpi ne, %1, %c0_i32_0 : i32
    scf.if %2 {
      %cst_35 = arith.constant -1.000000e+30 : f32
      %51 = vector.broadcast %cst_35 : f32 to vector<8x1xf32>
      %c0_36 = arith.constant 0 : index
      %c0_37 = arith.constant 0 : index
      %52 = vector.load %arg9[%c0_36, %c0_37] : memref<8x1xf32, #tpu.memory_space<vmem>>, vector<8x1xf32>
      tpu.vector_store %arg9[%c0_36, %c0_37], %51 {strides = array<i32>} : memref<8x1xf32, #tpu.memory_space<vmem>>, vector<8x1xf32>,
      %cst_38 = arith.constant 0.000000e+00 : f32
      %53 = vector.broadcast %cst_38 : f32 to vector<8x1xf32>
      %c0_39 = arith.constant 0 : index
      %c0_40 = arith.constant 0 : index
      %54 = vector.load %arg10[%c0_39, %c0_40] : memref<8x1xf32, #tpu.memory_space<vmem>>, vector<8x1xf32>
      tpu.vector_store %arg10[%c0_39, %c0_40], %53 {strides = array<i32>} : memref<8x1xf32, #tpu.memory_space<vmem>>, vector<8x1xf32>,
      %cst_41 = arith.constant 0.000000e+00 : f32
      %55 = vector.broadcast %cst_41 : f32 to vector<8x512xf32>
      %c0_42 = arith.constant 0 : index
      %c0_43 = arith.constant 0 : index
      %56 = vector.load %arg11[%c0_42, %c0_43] : memref<8x512xf32, #tpu.memory_space<vmem>>, vector<8x512xf32>
      tpu.vector_store %arg11[%c0_42, %c0_43], %55 {strides = array<i32>} : memref<8x512xf32, #tpu.memory_space<vmem>>, vector<8x512xf32>,
    } else {
    }
    %c0 = arith.constant 0 : index
    %c0_1 = arith.constant 0 : index
    %c0_2 = arith.constant 0 : index
    %3 = vector.load %arg3[%c0, %c0_1, %c0_2] : memref<1x8x512xbf16, #tpu.memory_space<vmem>>, vector<1x8x512xbf16>
    %4 = vector.shape_cast %3 : vector<1x8x512xbf16> to vector<8x512xbf16>
    %c0_3 = arith.constant 0 : index
    %c0_4 = arith.constant 0 : index
    %c0_5 = arith.constant 0 : index
    %5 = vector.load %arg4[%c0_3, %c0_4, %c0_5] : memref<1x128x512xbf16, #tpu.memory_space<vmem>>, vector<1x128x512xbf16>
    %6 = vector.shape_cast %5 : vector<1x128x512xbf16> to vector<128x512xbf16>
    %c0_6 = arith.constant 0 : index
    %c0_7 = arith.constant 0 : index
    %c0_8 = arith.constant 0 : index
    %7 = vector.load %arg5[%c0_6, %c0_7, %c0_8] : memref<1x128x512xbf16, #tpu.memory_space<vmem>>, vector<1x128x512xbf16>
    %8 = vector.shape_cast %7 : vector<1x128x512xbf16> to vector<128x512xbf16>
    %c0_9 = arith.constant 0 : index
    %c0_10 = arith.constant 0 : index
    %c0_11 = arith.constant 0 : index
    %9 = vector.load %arg6[%c0_9, %c0_10, %c0_11] : memref<1x8x128xi8, #tpu.memory_space<vmem>>, vector<1x8x128xi8>
    %10 = vector.shape_cast %9 : vector<1x8x128xi8> to vector<8x128xi8>
    %cst = arith.constant dense<0.000000e+00> : vector<8x128xf32>
    %11 = tpu.matmul %4, %6, %cst {dimension_numbers = #tpu.dot_dimension_numbers<[1], [1], [0], [0], [0, 0, 1, 0], [], []>} : vector<8x512xbf16>, vector<128x512xbf16>, vector<8x128xf32> -> vector<8x128xf32>
    %cst_12 = arith.constant 0.0441941731 : f32
    %12 = vector.broadcast %cst_12 : f32 to vector<8x128xf32>
    %13 = arith.mulf %11, %12 : vector<8x128xf32>
    %c0_i8 = arith.constant 0 : i8
    %14 = vector.broadcast %c0_i8 : i8 to vector<8x128xi8>
    %15 = arith.cmpi ne, %10, %14 : vector<8x128xi8>
    %cst_13 = arith.constant 0xFF800000 : f32
    %16 = vector.broadcast %cst_13 : f32 to vector<8x128xf32>
    %17 = arith.select %15, %16, %13 : vector<8x128xi1>, vector<8x128xf32>
    %c128_i32 = arith.constant 128 : i32
    %18 = arith.muli %arg2, %c128_i32 : i32
    %19 = tpu.assume_multiple %18, 128 : i32
    %c0_14 = arith.constant 0 : index
    %c0_15 = arith.constant 0 : index
    %20 = arith.index_cast %19 : i32 to index
    %21 = vector.load %arg7[%c0_14, %c0_15, %20] : memref<1x8x128xf32, #tpu.memory_space<vmem>>, vector<1x8x128xf32>
    %22 = vector.shape_cast %21 : vector<1x8x128xf32> to vector<8x128xf32>
    %23 = vector.shape_cast %17 : vector<8x128xf32> to vector<1x8x128xf32>
    tpu.vector_store %arg7[%c0_14, %c0_15, %20], %23 {strides = array<i32>} : memref<1x8x128xf32, #tpu.memory_space<vmem>>, vector<1x8x128xf32>,
    %c0_16 = arith.constant 0 : index
    %c0_17 = arith.constant 0 : index
    %24 = vector.load %arg9[%c0_16, %c0_17] : memref<8x1xf32, #tpu.memory_space<vmem>>, vector<8x1xf32>
    %cst_18 = arith.constant dense<0xFF800000> : vector<8xf32>
    %25 = vector.multi_reduction <maximumf>, %17, %cst_18 [1] : vector<8x128xf32> to vector<8xf32>
    %26 = vector.shape_cast %25 : vector<8xf32> to vector<8x1xf32>
    %27 = arith.maximumf %24, %26 : vector<8x1xf32>
    %c0_19 = arith.constant 0 : index
    %c0_20 = arith.constant 0 : index
    %28 = vector.load %arg9[%c0_19, %c0_20] : memref<8x1xf32, #tpu.memory_space<vmem>>, vector<8x1xf32>
    %29 = arith.subf %28, %27 : vector<8x1xf32>
    %30 = math.exp %29 : vector<8x1xf32>
    %31 = vector.broadcast %27 : vector<8x1xf32> to vector<8x128xf32>
    %32 = arith.subf %17, %31 : vector<8x128xf32>
    %33 = math.exp %32 : vector<8x128xf32>
    %c0_21 = arith.constant 0 : index
    %c0_22 = arith.constant 0 : index
    %34 = vector.load %arg10[%c0_21, %c0_22] : memref<8x1xf32, #tpu.memory_space<vmem>>, vector<8x1xf32>
    %35 = arith.mulf %30, %34 : vector<8x1xf32>
    %cst_23 = arith.constant dense<0.000000e+00> : vector<8xf32>
    %36 = vector.multi_reduction <add>, %33, %cst_23 [1] : vector<8x128xf32> to vector<8xf32>
    %37 = vector.shape_cast %36 : vector<8xf32> to vector<8x1xf32>
    %38 = arith.addf %35, %37 : vector<8x1xf32>
    %c0_24 = arith.constant 0 : index
    %c0_25 = arith.constant 0 : index
    %39 = vector.load %arg10[%c0_24, %c0_25] : memref<8x1xf32, #tpu.memory_space<vmem>>, vector<8x1xf32>
    tpu.vector_store %arg10[%c0_24, %c0_25], %38 {strides = array<i32>} : memref<8x1xf32, #tpu.memory_space<vmem>>, vector<8x1xf32>,
    %c0_26 = arith.constant 0 : index
    %c0_27 = arith.constant 0 : index
    %40 = vector.load %arg11[%c0_26, %c0_27] : memref<8x512xf32, #tpu.memory_space<vmem>>, vector<8x512xf32>
    %41 = vector.broadcast %30 : vector<8x1xf32> to vector<8x512xf32>
    %42 = arith.mulf %41, %40 : vector<8x512xf32>
    %43 = arith.truncf %33 : vector<8x128xf32> to vector<8x128xbf16>
    %cst_28 = arith.constant dense<0.000000e+00> : vector<8x512xf32>
    %44 = tpu.matmul %43, %8, %cst_28 {dimension_numbers = #tpu.dot_dimension_numbers<[1], [0], [0], [1], [0, 0, 1, 1], [], []>} : vector<8x128xbf16>, vector<128x512xbf16>, vector<8x512xf32> -> vector<8x512xf32>
    %45 = arith.addf %42, %44 : vector<8x512xf32>
    %c0_29 = arith.constant 0 : index
    %c0_30 = arith.constant 0 : index
    %46 = vector.load %arg11[%c0_29, %c0_30] : memref<8x512xf32, #tpu.memory_space<vmem>>, vector<8x512xf32>
    tpu.vector_store %arg11[%c0_29, %c0_30], %45 {strides = array<i32>} : memref<8x512xf32, #tpu.memory_space<vmem>>, vector<8x512xf32>,
    %c0_31 = arith.constant 0 : index
    %c0_32 = arith.constant 0 : index
    %47 = vector.load %arg9[%c0_31, %c0_32] : memref<8x1xf32, #tpu.memory_space<vmem>>, vector<8x1xf32>
    tpu.vector_store %arg9[%c0_31, %c0_32], %27 {strides = array<i32>} : memref<8x1xf32, #tpu.memory_space<vmem>>, vector<8x1xf32>,
    %c0_i32_33 = arith.constant 0 : i32
    %48 = arith.cmpi eq, %arg2, %c0_i32_33 : i32
    %49 = arith.extui %48 : i1 to i32
    %c0_i32_34 = arith.constant 0 : i32
    %50 = arith.cmpi ne, %49, %c0_i32_34 : i32
    scf.if %50 {
      %c0_35 = arith.constant 0 : index
      %c0_36 = arith.constant 0 : index
      %51 = vector.load %arg10[%c0_35, %c0_36] : memref<8x1xf32, #tpu.memory_space<vmem>>, vector<8x1xf32>
      %52 = tpu.reciprocal %51 : vector<8x1xf32> -> vector<8x1xf32>
      %c0_37 = arith.constant 0 : index
      %c0_38 = arith.constant 0 : index
      %c0_39 = arith.constant 0 : index
      %53 = vector.load %arg7[%c0_37, %c0_38, %c0_39] : memref<1x8x128xf32, #tpu.memory_space<vmem>>, vector<1x8x128xf32>
      %54 = vector.shape_cast %53 : vector<1x8x128xf32> to vector<8x128xf32>
      %c0_40 = arith.constant 0 : index
      %c0_41 = arith.constant 0 : index
      %55 = vector.load %arg9[%c0_40, %c0_41] : memref<8x1xf32, #tpu.memory_space<vmem>>, vector<8x1xf32>
      %56 = vector.broadcast %55 : vector<8x1xf32> to vector<8x128xf32>
      %57 = arith.subf %54, %56 : vector<8x128xf32>
      %58 = math.exp %57 : vector<8x128xf32>
      %59 = vector.broadcast %52 : vector<8x1xf32> to vector<8x128xf32>
      %60 = arith.mulf %58, %59 : vector<8x128xf32>
      %c0_42 = arith.constant 0 : index
      %c0_43 = arith.constant 0 : index
      %c0_44 = arith.constant 0 : index
      %61 = vector.load %arg7[%c0_42, %c0_43, %c0_44] : memref<1x8x128xf32, #tpu.memory_space<vmem>>, vector<1x8x128xf32>
      %62 = vector.shape_cast %61 : vector<1x8x128xf32> to vector<8x128xf32>
      %63 = vector.shape_cast %60 : vector<8x128xf32> to vector<1x8x128xf32>
      tpu.vector_store %arg7[%c0_42, %c0_43, %c0_44], %63 {strides = array<i32>} : memref<1x8x128xf32, #tpu.memory_space<vmem>>, vector<1x8x128xf32>,
      %c0_45 = arith.constant 0 : index
      %c0_46 = arith.constant 0 : index
      %64 = vector.load %arg11[%c0_45, %c0_46] : memref<8x512xf32, #tpu.memory_space<vmem>>, vector<8x512xf32>
      %65 = vector.broadcast %52 : vector<8x1xf32> to vector<8x512xf32>
      %66 = arith.mulf %64, %65 : vector<8x512xf32>
      %c0_47 = arith.constant 0 : index
      %c0_48 = arith.constant 0 : index
      %c0_49 = arith.constant 0 : index
      %67 = vector.load %arg8[%c0_47, %c0_48, %c0_49] : memref<1x8x512xf32, #tpu.memory_space<vmem>>, vector<1x8x512xf32>
      %68 = vector.shape_cast %67 : vector<1x8x512xf32> to vector<8x512xf32>
      %69 = vector.shape_cast %66 : vector<8x512xf32> to vector<1x8x512xf32>
      tpu.vector_store %arg8[%c0_47, %c0_48, %c0_49], %69 {strides = array<i32>} : memref<1x8x512xf32, #tpu.memory_space<vmem>>, vector<1x8x512xf32>,
    } else {
    }
    return
  }
  func.func @transform_0(%arg0: i32, %arg1: i32, %arg2: i32) -> (i32, i32, i32) {
    %c0_i32 = arith.constant 0 : i32
    %c0_i32_0 = arith.constant 0 : i32
    return %arg0, %arg1, %c0_i32 : i32, i32, i32
  }
  func.func @transform_1(%arg0: i32, %arg1: i32, %arg2: i32) -> (i32, i32, i32) {
    %c0_i32 = arith.constant 0 : i32
    %c0_i32_0 = arith.constant 0 : i32
    return %arg0, %arg2, %c0_i32 : i32, i32, i32
  }
  func.func @transform_2(%arg0: i32, %arg1: i32, %arg2: i32) -> (i32, i32, i32) {
    %c0_i32 = arith.constant 0 : i32
    %c0_i32_0 = arith.constant 0 : i32
    return %arg0, %arg2, %c0_i32 : i32, i32, i32
  }
  func.func @transform_3(%arg0: i32, %arg1: i32, %arg2: i32) -> (i32, i32, i32) {
    %c0_i32 = arith.constant 0 : i32
    return %arg0, %arg1, %arg2 : i32, i32, i32
  }
  func.func @transform_4(%arg0: i32, %arg1: i32, %arg2: i32) -> (i32, i32, i32) {
    %c0_i32 = arith.constant 0 : i32
    %c0_i32_0 = arith.constant 0 : i32
    return %arg0, %arg1, %c0_i32 : i32, i32, i32
  }
  func.func @transform_5(%arg0: i32, %arg1: i32, %arg2: i32) -> (i32, i32, i32) {
    %c0_i32 = arith.constant 0 : i32
    %c0_i32_0 = arith.constant 0 : i32
    return %arg0, %arg1, %c0_i32 : i32, i32, i32
  }
}

</mosaic_0001>

<llo_original>
// kernel: tpu_custom_call.1
$region0: #{tpu_custom_call.1}
  #allocation0 [shape = 'u32[]', space=smem, size = 0x4, offset = 0x4, fixed_abs, tag = 'smem constant byte address 0x4 - core index']
  #allocation1 [shape = 'u32[72,128]{1,0:T(1,128)}', space=vmem, size = 0x9000, scoped, tag = 'internal scratch']
  #allocation2 [shape = 'f32[8,1]{1,0:T(8,128)}', space=vmem, size = 0x1000, scoped, tag = 'scratch operand']
  #allocation3 [shape = 'f32[8,1]{1,0:T(8,128)}', space=vmem, size = 0x1000, scoped, tag = 'scratch operand']
  #allocation4 [shape = 'f32[8,512]{1,0:T(8,128)}', space=vmem, size = 0x4000, scoped, tag = 'scratch operand']
  %s0 = inlined_call_operand.hbm [shape: bf16[2,8,512], index: 0, kind: input, shape index: {}]
  %s1 = inlined_call_operand.hbm [shape: bf16[2,128,512], index: 1, kind: input, shape index: {}]
  %s2 = inlined_call_operand.hbm [shape: bf16[2,128,512], index: 2, kind: input, shape index: {}]
  %s3 = inlined_call_operand.hbm [shape: s8[2,8,128], index: 3, kind: input, shape index: {}]
  %s4 = inlined_call_operand.hbm [shape: f32[2,8,128], index: 4, kind: output, shape index: {0}]
  %s5 = inlined_call_operand.hbm [shape: f32[2,8,512], index: 5, kind: output, shape index: {1}]
  %6 = xla_tuple %s4, %s5
  %s7 = sld [smem:[#allocation0]]
  $region81: #{tpu_custom_call.1} parent=0
    _
  %s9 = ssub.s32 1, %s7
  %s10 = scalar_select 0, %s9, %s7
  $region1: #{tpu_custom_call.1} parent=0
    #allocation5 [shape = 'u8[16384]{0}', space=vmem, size = 0x4000, scoped, tag = 'input window, operand 0']
    #allocation6 [shape = 's32[2]{0}', space=sflag, size = 0x8, scoped, tag = 'scoped memory for tpu_custom_call.1']
    #allocation7 [shape = 's32[2]{0}', space=sflag, size = 0x8, scoped, tag = 'scoped memory for tpu_custom_call.1']
    #allocation8 [shape = 'u8[262144]{0}', space=vmem, size = 0x40000, scoped, tag = 'input window, operand 1']
    #allocation9 [shape = 's32[2]{0}', space=sflag, size = 0x8, scoped, tag = 'scoped memory for tpu_custom_call.1']
    #allocation10 [shape = 'u8[262144]{0}', space=vmem, size = 0x40000, scoped, tag = 'input window, operand 2']
    #allocation11 [shape = 'u8[2048]{0}', space=vmem, size = 0x800, scoped, tag = 'input window, operand 3']
    #allocation12 [shape = 's32[2]{0}', space=sflag, size = 0x8, scoped, tag = 'scoped memory for tpu_custom_call.1']
    #allocation13 [shape = 'u8[8192]{0}', space=vmem, size = 0x2000, scoped, tag = 'output window, operand 0']
    #allocation14 [shape = 'u8[32768]{0}', space=vmem, size = 0x8000, scoped, tag = 'output window, operand 1']
    #allocation15 [shape = 's32[2]{0}', space=sflag, size = 0x8, scoped, tag = 'scoped memory for tpu_custom_call.1']
    %11 = vsyncpa [#allocation6], 0
    %s12 = scalar_lea.sflag [#allocation6], 1
    %13 = vsyncpa %s12, 0
    %14 = vsyncpa [#allocation9], 0
    %s15 = scalar_lea.sflag [#allocation9], 1
    %16 = vsyncpa %s15, 0
    %17 = vsyncpa [#allocation12], 0
    %s18 = scalar_lea.sflag [#allocation12], 1
    %19 = vsyncpa %s18, 0
    %20 = vsyncpa [#allocation7], 0
    %s21 = scalar_lea.sflag [#allocation7], 1
    %22 = vsyncpa %s21, 0
    %23 = vsyncpa [#allocation15], 0
    %s24 = scalar_lea.sflag [#allocation15], 1
    %25 = vsyncpa %s24, 0
    loop: start=0, step=1, limit=4
    $region2: #{tpu_custom_call.1} parent=1 // loop_pre_header
      _
    $region3: #{tpu_custom_call.1} parent=1 // loop_header
      %s27 = sphi 0, %s31
      %p28 = scmp.ge.s32.totalorder %s27, 4
      %s34 = sphi 0, %s53
      %s35 = sphi 0, %s49
      %s36 = sphi 0, %s45
      %s37 = sphi 0, %s34
      %s38 = sphi 0, %s35
      %s39 = sphi 0, %s36
      %s40 = sphi 0, %s37
      %s41 = sphi 0, %s38
      %s42 = sphi 0, %s39
      %s58 = sphi 0, %s60
      %s61 = sphi 0, %s58
      %s62 = sphi 0, %s61
      %s78 = sphi 0, %s62
      %s86 = sphi 0, %s88
      %s89 = sphi 0, %s86
      %s90 = sphi 0, %s89
      %s106 = sphi 0, %s90
      %s114 = sphi 0, %s116
      %s117 = sphi 0, %s114
      %s118 = sphi 0, %s117
      %s134 = sphi 0, %s118
      %s144 = sphi 0, %s146
      %s147 = sphi 0, %s144
      %s148 = sphi 0, %s147
      %s164 = sphi 0, %s148
      %s172 = sphi 0, %s174
      %s175 = sphi 0, %s172
      %s176 = sphi 0, %s175
      %s192 = sphi 0, %s176
      %s200 = sphi 0, %s202
      %s203 = sphi 0, %s200
      %s204 = sphi 0, %s203
      %s220 = sphi 0, %s204
    $region4: #{tpu_custom_call.1} parent=1 // loop_header_branch
      %30 = sbr.rel (%p28) target = $region8
    $region5: #{tpu_custom_call.1} parent=1 // loop_body
      %s32 = ssub.s32 %s27, 1
      %s33 = ssub.s32 %s27, 2
      %s43 = sadd.s32 1, %s36
      %p44 = scmp.ge.s32.totalorder %s43, 1
      %s45 = scalar_select %p44, 0, %s43
      %s46 = sadd.s32 1, %s35
      %s47 = scalar_select %p44, %s46, %s35
      %p48 = scmp.ge.s32.totalorder %s47, 1
      %s49 = scalar_select %p48, 0, %s47
      %s50 = sadd.s32 1, %s34
      %s51 = scalar_select %p48, %s50, %s34
      %p52 = scmp.ge.s32.totalorder %s51, 2
      %s53 = scalar_select %p52, 0, %s51
      %s54 = ssub.s32 %s34, %s53
      %s55 = ssub.s32 %s35, %s49
      %s56 = sor.u32 %s54, %s55
      %p57 = scmp.eq.s32.totalorder %s56, 0
      %s59 = sadd.s32 %s58, 1
      %s60 = scalar_select %p57, %s58, %s59
      %p63 = pneg %p57
      %p64 = scmp.eq.s32.totalorder %s27, 1
      %p65 = por %p63, %p64
      %p66 = scmp.ne.s32.totalorder %s58, %s61
      %p67 = scmp.eq.s32.totalorder %s27, 0
      %p68 = por %p66, %p67
      %p69 = scmp.ne.s32.totalorder %s58, %s61
      %p70 = scmp.eq.s32.totalorder %s32, 1
      %p71 = por %p69, %p70
      %p72 = scmp.ne.s32.totalorder %s61, %s62
      %p73 = scmp.eq.s32.totalorder %s32, 0
      %p74 = por %p72, %p73
      %p75 = scmp.ne.s32.totalorder %s61, %s62
      %p76 = scmp.eq.s32.totalorder %s33, 1
      %p77 = por %p75, %p76
      %p79 = scmp.ne.s32.totalorder %s62, %s78
      %p80 = scmp.eq.s32.totalorder %s33, 0
      %p81 = por %p79, %p80
      %s82 = ssub.s32 %s34, %s53
      %s83 = ssub.s32 %s36, %s45
      %s84 = sor.u32 %s82, %s83
      %p85 = scmp.eq.s32.totalorder %s84, 0
      %s87 = sadd.s32 %s86, 1
      %s88 = scalar_select %p85, %s86, %s87
      %p91 = pneg %p85
      %p92 = scmp.eq.s32.totalorder %s27, 1
      %p93 = por %p91, %p92
      %p94 = scmp.ne.s32.totalorder %s86, %s89
      %p95 = scmp.eq.s32.totalorder %s27, 0
      %p96 = por %p94, %p95
      %p97 = scmp.ne.s32.totalorder %s86, %s89
      %p98 = scmp.eq.s32.totalorder %s32, 1
      %p99 = por %p97, %p98
      %p100 = scmp.ne.s32.totalorder %s89, %s90
      %p101 = scmp.eq.s32.totalorder %s32, 0
      %p102 = por %p100, %p101
      %p103 = scmp.ne.s32.totalorder %s89, %s90
      %p104 = scmp.eq.s32.totalorder %s33, 1
      %p105 = por %p103, %p104
      %p107 = scmp.ne.s32.totalorder %s90, %s106
      %p108 = scmp.eq.s32.totalorder %s33, 0
      %p109 = por %p107, %p108
      %s110 = ssub.s32 %s34, %s53
      %s111 = ssub.s32 %s36, %s45
      %s112 = sor.u32 %s110, %s111
      %p113 = scmp.eq.s32.totalorder %s112, 0
      %s115 = sadd.s32 %s114, 1
      %s116 = scalar_select %p113, %s114, %s115
      %p119 = pneg %p113
      %p120 = scmp.eq.s32.totalorder %s27, 1
      %p121 = por %p119, %p120
      %p122 = scmp.ne.s32.totalorder %s114, %s117
      %p123 = scmp.eq.s32.totalorder %s27, 0
      %p124 = por %p122, %p123
      %p125 = scmp.ne.s32.totalorder %s114, %s117
      %p126 = scmp.eq.s32.totalorder %s32, 1
      %p127 = por %p125, %p126
      %p128 = scmp.ne.s32.totalorder %s117, %s118
      %p129 = scmp.eq.s32.totalorder %s32, 0
      %p130 = por %p128, %p129
      %p131 = scmp.ne.s32.totalorder %s117, %s118
      %p132 = scmp.eq.s32.totalorder %s33, 1
      %p133 = por %p131, %p132
      %p135 = scmp.ne.s32.totalorder %s118, %s134
      %p136 = scmp.eq.s32.totalorder %s33, 0
      %p137 = por %p135, %p136
      %s138 = ssub.s32 %s34, %s53
      %s139 = ssub.s32 %s35, %s49
      %s140 = sor.u32 %s138, %s139
      %s141 = ssub.s32 %s36, %s45
      %s142 = sor.u32 %s140, %s141
      %p143 = scmp.eq.s32.totalorder %s142, 0
      %s145 = sadd.s32 %s144, 1
      %s146 = scalar_select %p143, %s144, %s145
      %p149 = pneg %p143
      %p150 = scmp.eq.s32.totalorder %s27, 1
      %p151 = por %p149, %p150
      %p152 = scmp.ne.s32.totalorder %s144, %s147
      %p153 = scmp.eq.s32.totalorder %s27, 0
      %p154 = por %p152, %p153
      %p155 = scmp.ne.s32.totalorder %s144, %s147
      %p156 = scmp.eq.s32.totalorder %s32, 1
      %p157 = por %p155, %p156
      %p158 = scmp.ne.s32.totalorder %s147, %s148
      %p159 = scmp.eq.s32.totalorder %s32, 0
      %p160 = por %p158, %p159
      %p161 = scmp.ne.s32.totalorder %s147, %s148
      %p162 = scmp.eq.s32.totalorder %s33, 1
      %p163 = por %p161, %p162
      %p165 = scmp.ne.s32.totalorder %s148, %s164
      %p166 = scmp.eq.s32.totalorder %s33, 0
      %p167 = por %p165, %p166
      %s168 = ssub.s32 %s34, %s53
      %s169 = ssub.s32 %s35, %s49
      %s170 = sor.u32 %s168, %s169
      %p171 = scmp.eq.s32.totalorder %s170, 0
      %s173 = sadd.s32 %s172, 1
      %s174 = scalar_select %p171, %s172, %s173
      %p177 = pneg %p171
      %p178 = scmp.eq.s32.totalorder %s27, 1
      %p179 = por %p177, %p178
      %p180 = scmp.ne.s32.totalorder %s172, %s175
      %p181 = scmp.eq.s32.totalorder %s27, 0
      %p182 = por %p180, %p181
      %p183 = scmp.ne.s32.totalorder %s172, %s175
      %p184 = scmp.eq.s32.totalorder %s32, 1
      %p185 = por %p183, %p184
      %p186 = scmp.ne.s32.totalorder %s175, %s176
      %p187 = scmp.eq.s32.totalorder %s32, 0
      %p188 = por %p186, %p187
      %p189 = scmp.ne.s32.totalorder %s175, %s176
      %p190 = scmp.eq.s32.totalorder %s33, 1
      %p191 = por %p189, %p190
      %p193 = scmp.ne.s32.totalorder %s176, %s192
      %p194 = scmp.eq.s32.totalorder %s33, 0
      %p195 = por %p193, %p194
      %s196 = ssub.s32 %s34, %s53
      %s197 = ssub.s32 %s35, %s49
      %s198 = sor.u32 %s196, %s197
      %p199 = scmp.eq.s32.totalorder %s198, 0
      %s201 = sadd.s32 %s200, 1
      %s202 = scalar_select %p199, %s200, %s201
      %p205 = pneg %p199
      %p206 = scmp.eq.s32.totalorder %s27, 1
      %p207 = por %p205, %p206
      %p208 = scmp.ne.s32.totalorder %s200, %s203
      %p209 = scmp.eq.s32.totalorder %s27, 0
      %p210 = por %p208, %p209
      %p211 = scmp.ne.s32.totalorder %s200, %s203
      %p212 = scmp.eq.s32.totalorder %s32, 1
      %p213 = por %p211, %p212
      %p214 = scmp.ne.s32.totalorder %s203, %s204
      %p215 = scmp.eq.s32.totalorder %s32, 0
      %p216 = por %p214, %p215
      %p217 = scmp.ne.s32.totalorder %s203, %s204
      %p218 = scmp.eq.s32.totalorder %s33, 1
      %p219 = por %p217, %p218
      %p221 = scmp.ne.s32.totalorder %s204, %s220
      %p222 = scmp.eq.s32.totalorder %s33, 0
      %p223 = por %p221, %p222
      %p224 = scmp.le.s32.totalorder 1, %s27
      %p225 = scmp.lt.s32.totalorder %s27, 3
      %p226 = pnand %p224, %p225
      %p227 = pneg %p226
      // Predicated region
      $region9: #{tpu_custom_call.1} parent=5 // pred_check
        _
      $region10: #{tpu_custom_call.1} parent=5 // pred_check_branch
        %229 = sbr.rel (%p226) target = $region12
      $region11: #{tpu_custom_call.1} parent=5 // pred_region
        %s230 = ssub.s32 %s27, 1
      $region12: #{tpu_custom_call.1} parent=5 // pred_fallthru
        _
      %p231 = scmp.lt.s32.totalorder %s27, 2
      // Predicated region
      $region13: #{tpu_custom_call.1} parent=5 // pred_check
        %p232 = pneg %p231
      $region14: #{tpu_custom_call.1} parent=5 // pred_check_branch
        %234 = sbr.rel (%p232) target = $region16
      $region15: #{tpu_custom_call.1} parent=5 // pred_region
        // Predicated region
        $region17: #{tpu_custom_call.1} parent=15 // pred_check
          %p235 = pneg %p68
        $region18: #{tpu_custom_call.1} parent=15 // pred_check_branch
          %237 = sbr.rel (%p235) target = $region20
        $region19: #{tpu_custom_call.1} parent=15 // pred_region
          %s238 = sand.u32 %s58, 1
          %s239 = scalar_lea.sflag [#allocation6], %s238
          %s240 = sand.u32 %s58, 1
          %s241 = smul.addr %s240, 16
          %s242 = scalar_lea.vmem [#allocation5], %s241
          %244 = vsyncadd %s239, 0
          %s245 = smul.addr %s35, 4
          %s246 = smul.addr %s34, 4
          %s247 = sadd.s32 %s245, %s246
          %s248 = smul.addr %s247, 4
          %s249 = scalar_lea.hbm %s0, %s248
          %s251 = sshll.u32 %s249, 4
          %s252 = int_to_ptr.hbm [resolvable:$true] %s251
          %s253 = sshll.u32 %s242, 4
          %s254 = int_to_ptr.vmem [resolvable:$true] %s253
          %256 = dma.hbm_to_vmem [thread:$0]  %s252, 256, %s254, %s239
        $region20: #{tpu_custom_call.1} parent=15 // pred_fallthru
          _
        // Predicated region
        $region21: #{tpu_custom_call.1} parent=15 // pred_check
          %p257 = pneg %p96
        $region22: #{tpu_custom_call.1} parent=15 // pred_check_branch
          %259 = sbr.rel (%p257) target = $region24
        $region23: #{tpu_custom_call.1} parent=15 // pred_region
          %s260 = sand.u32 %s27, 1
          %s261 = scalar_lea.sflag [#allocation9], %s260
          %s262 = sand.u32 %s86, 1
          %s263 = smul.addr %s262, 256
          %s264 = scalar_lea.vmem [#allocation8], %s263
          %s265 = smul.u32 16, %s36
          %267 = vsyncadd %s261, 0
          %s268 = smul.addr %s265, 4
          %s269 = smul.addr %s34, 64
          %s270 = sadd.s32 %s268, %s269
          %s271 = smul.addr %s270, 4
          %s272 = scalar_lea.hbm %s1, %s271
          %s273 = sshll.u32 %s272, 4
          %s274 = int_to_ptr.hbm [resolvable:$true] %s273
          %s275 = sshll.u32 %s264, 4
          %s276 = int_to_ptr.vmem [resolvable:$true] %s275
          %281 = dma.hbm_to_vmem [thread:$0]  %s274, 4096, %s276, %s261, 256, 256, 16
        $region24: #{tpu_custom_call.1} parent=15 // pred_fallthru
          _
        // Predicated region
        $region25: #{tpu_custom_call.1} parent=15 // pred_check
          %p282 = pneg %p124
        $region26: #{tpu_custom_call.1} parent=15 // pred_check_branch
          %284 = sbr.rel (%p282) target = $region28
        $region27: #{tpu_custom_call.1} parent=15 // pred_region
          %s285 = sand.u32 %s27, 1
          %s286 = scalar_lea.sflag [#allocation9], %s285
          %s287 = sand.u32 %s114, 1
          %s288 = smul.addr %s287, 256
          %s289 = scalar_lea.vmem [#allocation10], %s288
          %s290 = smul.u32 16, %s36
          %292 = vsyncadd %s286, 0
          %s293 = smul.addr %s290, 4
          %s294 = smul.addr %s34, 64
          %s295 = sadd.s32 %s293, %s294
          %s296 = smul.addr %s295, 4
          %s297 = scalar_lea.hbm %s2, %s296
          %s298 = sshll.u32 %s297, 4
          %s299 = int_to_ptr.hbm [resolvable:$true] %s298
          %s300 = sshll.u32 %s289, 4
          %s301 = int_to_ptr.vmem [resolvable:$true] %s300
          %306 = dma.hbm_to_vmem [thread:$0]  %s299, 4096, %s301, %s286, 256, 256, 16
        $region28: #{tpu_custom_call.1} parent=15 // pred_fallthru
          _
        // Predicated region
        $region29: #{tpu_custom_call.1} parent=15 // pred_check
          %p307 = pneg %p154
        $region30: #{tpu_custom_call.1} parent=15 // pred_check_branch
          %309 = sbr.rel (%p307) target = $region32
        $region31: #{tpu_custom_call.1} parent=15 // pred_region
          %s310 = sand.u32 %s144, 1
          %s311 = scalar_lea.sflag [#allocation12], %s310
          %s312 = sand.u32 %s144, 1
          %s313 = smul.addr %s312, 2
          %s314 = scalar_lea.vmem [#allocation11], %s313
          %316 = vsyncadd %s311, 0
          %s317 = sadd.s32 %s36, %s35
          %s318 = sadd.s32 %s317, %s34
          %s319 = smul.addr %s318, 2
          %s320 = scalar_lea.hbm %s3, %s319
          %s322 = sshll.u32 %s320, 4
          %s323 = int_to_ptr.hbm [resolvable:$true] %s322
          %s324 = sshll.u32 %s314, 4
          %s325 = int_to_ptr.vmem [resolvable:$true] %s324
          %327 = dma.hbm_to_vmem [thread:$0]  %s323, 32, %s325, %s311
        $region32: #{tpu_custom_call.1} parent=15 // pred_fallthru
          _
      $region16: #{tpu_custom_call.1} parent=5 // pred_fallthru
        _
      %p328 = scmp.le.s32.totalorder 1, %s27
      %p329 = scmp.lt.s32.totalorder %s27, 3
      %p330 = pnand %p328, %p329
      %p331 = pneg %p330
      // Predicated region
      $region33: #{tpu_custom_call.1} parent=5 // pred_check
        _
      $region34: #{tpu_custom_call.1} parent=5 // pred_check_branch
        %333 = sbr.rel (%p330) target = $region36
      $region35: #{tpu_custom_call.1} parent=5 // pred_region
        %s334 = ssub.s32 %s27, 1
        %s335 = sand.u32 %s61, 1
        %s336 = scalar_lea.sflag [#allocation6], %s335
        %s337 = sand.u32 %s61, 1
        %s338 = smul.addr %s337, 16
        %s339 = scalar_lea.vmem [#allocation5], %s338
        // Predicated region
        $region37: #{tpu_custom_call.1} parent=35 // pred_check
          %p340 = pneg %p74
        $region38: #{tpu_custom_call.1} parent=35 // pred_check_branch
          %342 = sbr.rel (%p340) target = $region40
        $region39: #{tpu_custom_call.1} parent=35 // pred_region
          %344 = dma.done %s336, 256
        $region40: #{tpu_custom_call.1} parent=35 // pred_fallthru
          _
        %s345 = sand.u32 %s32, 1
        %s346 = scalar_lea.sflag [#allocation9], %s345
        %s347 = sand.u32 %s89, 1
        %s348 = smul.addr %s347, 256
        %s349 = scalar_lea.vmem [#allocation8], %s348
        // Predicated region
        $region41: #{tpu_custom_call.1} parent=35 // pred_check
          %p350 = pneg %p102
        $region42: #{tpu_custom_call.1} parent=35 // pred_check_branch
          %352 = sbr.rel (%p350) target = $region44
        $region43: #{tpu_custom_call.1} parent=35 // pred_region
          %354 = dma.done %s346, 4096
        $region44: #{tpu_custom_call.1} parent=35 // pred_fallthru
          _
        %s355 = sand.u32 %s32, 1
        %s356 = scalar_lea.sflag [#allocation9], %s355
        %s357 = sand.u32 %s117, 1
        %s358 = smul.addr %s357, 256
        %s359 = scalar_lea.vmem [#allocation10], %s358
        // Predicated region
        $region45: #{tpu_custom_call.1} parent=35 // pred_check
          %p360 = pneg %p130
        $region46: #{tpu_custom_call.1} parent=35 // pred_check_branch
          %362 = sbr.rel (%p360) target = $region48
        $region47: #{tpu_custom_call.1} parent=35 // pred_region
          %364 = dma.done %s356, 4096
        $region48: #{tpu_custom_call.1} parent=35 // pred_fallthru
          _
        %s365 = sand.u32 %s147, 1
        %s366 = scalar_lea.sflag [#allocation12], %s365
        %s367 = sand.u32 %s147, 1
        %s368 = smul.addr %s367, 2
        %s369 = scalar_lea.vmem [#allocation11], %s368
        // Predicated region
        $region49: #{tpu_custom_call.1} parent=35 // pred_check
          %p370 = pneg %p160
        $region50: #{tpu_custom_call.1} parent=35 // pred_check_branch
          %372 = sbr.rel (%p370) target = $region52
        $region51: #{tpu_custom_call.1} parent=35 // pred_region
          %374 = dma.done %s366, 32
        $region52: #{tpu_custom_call.1} parent=35 // pred_fallthru
          _
        %s375 = sand.u32 %s61, 1
        %s376 = scalar_lea.sflag [#allocation6], %s375
        %s377 = sand.u32 %s61, 1
        %s378 = smul.addr %s377, 16
        %s379 = scalar_lea.vmem [#allocation5], %s378
        %p380 = pneg %p74
        %p381 = pneg %p71
        %s382 = sand.u32 %s32, 1
        %s383 = scalar_lea.sflag [#allocation9], %s382
        %s384 = sand.u32 %s89, 1
        %s385 = smul.addr %s384, 256
        %s386 = scalar_lea.vmem [#allocation8], %s385
        %p387 = pneg %p102
        %p388 = pneg %p99
        %s389 = sand.u32 %s32, 1
        %s390 = scalar_lea.sflag [#allocation9], %s389
        %s391 = sand.u32 %s117, 1
        %s392 = smul.addr %s391, 256
        %s393 = scalar_lea.vmem [#allocation10], %s392
        %p394 = pneg %p130
        %p395 = pneg %p127
        %s396 = sand.u32 %s147, 1
        %s397 = scalar_lea.sflag [#allocation12], %s396
        %s398 = sand.u32 %s147, 1
        %s399 = smul.addr %s398, 2
        %s400 = scalar_lea.vmem [#allocation11], %s399
        %p401 = pneg %p160
        %p402 = pneg %p157
        %p403 = pneg %p188
        %p404 = pneg %p185
        %s405 = sand.u32 %s175, 1
        %s406 = scalar_lea.sflag [#allocation7], %s405
        %s407 = sand.u32 %s175, 1
        %s408 = smul.addr %s407, 8
        %s409 = scalar_lea.vmem [#allocation13], %s408
        %p410 = pneg %p216
        %p411 = pneg %p213
        %s412 = sand.u32 %s203, 1
        %s413 = scalar_lea.sflag [#allocation15], %s412
        %s414 = sand.u32 %s203, 1
        %s415 = smul.addr %s414, 32
        %s416 = scalar_lea.vmem [#allocation14], %s415
        %s417 = smul.u32 16, %s39
        %s418 = smul.u32 16, %s39
        %p421 = scmp.eq.s32.totalorder %s39, 0
        // Predicated region
        $region53: #{tpu_custom_call.1} parent=35 // pred_check
          %p422 = pneg %p421
        $region54: #{tpu_custom_call.1} parent=35 // pred_check_branch
          %424 = sbr.rel (%p422) target = $region56
        $region55: #{tpu_custom_call.1} parent=35 // pred_region
          %vm425 = vcmask 7168
          %426 = vst.msk [vmem:[#allocation2] sm:$0xff] %vm425, -1e+30
          %427 = vst.msk [vmem:[#allocation3] sm:$0xff] %vm425, 0.0
          %428 = vst [vmem:[#allocation4] sm:$0xff] 0.0
          %429 = vst [vmem:[#allocation4 + $0x8] sm:$0xff] 0.0
          %430 = vst [vmem:[#allocation4 + $0x10] sm:$0xff] 0.0
          %431 = vst [vmem:[#allocation4 + $0x18] sm:$0xff] 0.0
        $region56: #{tpu_custom_call.1} parent=35 // pred_fallthru
          _
        %v432 = vld [vmem:[%s339] sm:$0xff]
        %v433 = vld [vmem:[%s339 + $0x8] sm:$0xff]
        %v434 = vld [vmem:[%s349] sm:$0xff]
        %v435 = vld [vmem:[%s349 + $0x8] sm:$0xff]
        %v436 = vld [vmem:[%s349 + $0x10] sm:$0xff]
        %v437 = vld [vmem:[%s349 + $0x18] sm:$0xff]
        %v438 = vld [vmem:[%s349 + $0x20] sm:$0xff]
        %v439 = vld [vmem:[%s349 + $0x28] sm:$0xff]
        %v440 = vld [vmem:[%s349 + $0x30] sm:$0xff]
        %v441 = vld [vmem:[%s349 + $0x38] sm:$0xff]
        %v442 = vld [vmem:[%s349 + $0x40] sm:$0xff]
        %v443 = vld [vmem:[%s349 + $0x48] sm:$0xff]
        %v444 = vld [vmem:[%s349 + $0x50] sm:$0xff]
        %v445 = vld [vmem:[%s349 + $0x58] sm:$0xff]
        %v446 = vld [vmem:[%s349 + $0x60] sm:$0xff]
        %v447 = vld [vmem:[%s349 + $0x68] sm:$0xff]
        %v448 = vld [vmem:[%s349 + $0x70] sm:$0xff]
        %v449 = vld [vmem:[%s349 + $0x78] sm:$0xff]
        %v450 = vld [vmem:[%s349 + $0x80] sm:$0xff]
        %v451 = vld [vmem:[%s349 + $0x88] sm:$0xff]
        %v452 = vld [vmem:[%s349 + $0x90] sm:$0xff]
        %v453 = vld [vmem:[%s349 + $0x98] sm:$0xff]
        %v454 = vld [vmem:[%s349 + $0xa0] sm:$0xff]
        %v455 = vld [vmem:[%s349 + $0xa8] sm:$0xff]
        %v456 = vld [vmem:[%s349 + $0xb0] sm:$0xff]
        %v457 = vld [vmem:[%s349 + $0xb8] sm:$0xff]
        %v458 = vld [vmem:[%s349 + $0xc0] sm:$0xff]
        %v459 = vld [vmem:[%s349 + $0xc8] sm:$0xff]
        %v460 = vld [vmem:[%s349 + $0xd0] sm:$0xff]
        %v461 = vld [vmem:[%s349 + $0xd8] sm:$0xff]
        %v462 = vld [vmem:[%s349 + $0xe0] sm:$0xff]
        %v463 = vld [vmem:[%s349 + $0xe8] sm:$0xff]
        %v464 = vld [vmem:[%s349 + $0xf0] sm:$0xff]
        %v465 = vld [vmem:[%s349 + $0xf8] sm:$0xff]
        %v466 = vld [vmem:[%s359] sm:$0xff]
        %v467 = vld [vmem:[%s359 + $0x8] sm:$0xff]
        %v468 = vld [vmem:[%s359 + $0x10] sm:$0xff]
        %v469 = vld [vmem:[%s359 + $0x18] sm:$0xff]
        %v470 = vld [vmem:[%s359 + $0x20] sm:$0xff]
        %v471 = vld [vmem:[%s359 + $0x28] sm:$0xff]
        %v472 = vld [vmem:[%s359 + $0x30] sm:$0xff]
        %v473 = vld [vmem:[%s359 + $0x38] sm:$0xff]
        %v474 = vld [vmem:[%s359 + $0x40] sm:$0xff]
        %v475 = vld [vmem:[%s359 + $0x48] sm:$0xff]
        %v476 = vld [vmem:[%s359 + $0x50] sm:$0xff]
        %v477 = vld [vmem:[%s359 + $0x58] sm:$0xff]
        %v478 = vld [vmem:[%s359 + $0x60] sm:$0xff]
        %v479 = vld [vmem:[%s359 + $0x68] sm:$0xff]
        %v480 = vld [vmem:[%s359 + $0x70] sm:$0xff]
        %v481 = vld [vmem:[%s359 + $0x78] sm:$0xff]
        %v482 = vld [vmem:[%s359 + $0x80] sm:$0xff]
        %v483 = vld [vmem:[%s359 + $0x88] sm:$0xff]
        %v484 = vld [vmem:[%s359 + $0x90] sm:$0xff]
        %v485 = vld [vmem:[%s359 + $0x98] sm:$0xff]
        %v486 = vld [vmem:[%s359 + $0xa0] sm:$0xff]
        %v487 = vld [vmem:[%s359 + $0xa8] sm:$0xff]
        %v488 = vld [vmem:[%s359 + $0xb0] sm:$0xff]
        %v489 = vld [vmem:[%s359 + $0xb8] sm:$0xff]
        %v490 = vld [vmem:[%s359 + $0xc0] sm:$0xff]
        %v491 = vld [vmem:[%s359 + $0xc8] sm:$0xff]
        %v492 = vld [vmem:[%s359 + $0xd0] sm:$0xff]
        %v493 = vld [vmem:[%s359 + $0xd8] sm:$0xff]
        %v494 = vld [vmem:[%s359 + $0xe0] sm:$0xff]
        %v495 = vld [vmem:[%s359 + $0xe8] sm:$0xff]
        %v496 = vld [vmem:[%s359 + $0xf0] sm:$0xff]
        %v497 = vld [vmem:[%s359 + $0xf8] sm:$0xff]
        %v498 = vld [vmem:[%s369] sm:$0x3]
        %v501 = vunpack.c.l.b16 %v432
        %v502 = vunpack.c.h.b16 %v432
        %v503 = vunpack.c.l.b16 %v433
        %v504 = vunpack.c.h.b16 %v433
        %v505 = vpack.c.b16 %v501, %v501
        %v506 = vpack.c.b16 %v502, %v502
        %v507 = vpack.c.b16 %v503, %v503
        %v508 = vpack.c.b16 %v504, %v504
        %v545 = vunpack.c.l.b16 %v434
        %v546 = vunpack.c.h.b16 %v434
        %v547 = vunpack.c.l.b16 %v435
        %v548 = vunpack.c.h.b16 %v435
        %v549 = vunpack.c.l.b16 %v436
        %v550 = vunpack.c.h.b16 %v436
        %v551 = vunpack.c.l.b16 %v437
        %v552 = vunpack.c.h.b16 %v437
        %v553 = vunpack.c.l.b16 %v438
        %v554 = vunpack.c.h.b16 %v438
        %v555 = vunpack.c.l.b16 %v439
        %v556 = vunpack.c.h.b16 %v439
        %v557 = vunpack.c.l.b16 %v440
        %v558 = vunpack.c.h.b16 %v440
        %v559 = vunpack.c.l.b16 %v441
        %v560 = vunpack.c.h.b16 %v441
        %v561 = vunpack.c.l.b16 %v442
        %v562 = vunpack.c.h.b16 %v442
        %v563 = vunpack.c.l.b16 %v443
        %v564 = vunpack.c.h.b16 %v443
        %v565 = vunpack.c.l.b16 %v444
        %v566 = vunpack.c.h.b16 %v444
        %v567 = vunpack.c.l.b16 %v445
        %v568 = vunpack.c.h.b16 %v445
        %v569 = vunpack.c.l.b16 %v446
        %v570 = vunpack.c.h.b16 %v446
        %v571 = vunpack.c.l.b16 %v447
        %v572 = vunpack.c.h.b16 %v447
        %v573 = vunpack.c.l.b16 %v448
        %v574 = vunpack.c.h.b16 %v448
        %v575 = vunpack.c.l.b16 %v449
        %v576 = vunpack.c.h.b16 %v449
        %v577 = vunpack.c.l.b16 %v450
        %v578 = vunpack.c.h.b16 %v450
        %v579 = vunpack.c.l.b16 %v451
        %v580 = vunpack.c.h.b16 %v451
        %v581 = vunpack.c.l.b16 %v452
        %v582 = vunpack.c.h.b16 %v452
        %v583 = vunpack.c.l.b16 %v453
        %v584 = vunpack.c.h.b16 %v453
        %v585 = vunpack.c.l.b16 %v454
        %v586 = vunpack.c.h.b16 %v454
        %v587 = vunpack.c.l.b16 %v455
        %v588 = vunpack.c.h.b16 %v455
        %v589 = vunpack.c.l.b16 %v456
        %v590 = vunpack.c.h.b16 %v456
        %v591 = vunpack.c.l.b16 %v457
        %v592 = vunpack.c.h.b16 %v457
        %v593 = vunpack.c.l.b16 %v458
        %v594 = vunpack.c.h.b16 %v458
        %v595 = vunpack.c.l.b16 %v459
        %v596 = vunpack.c.h.b16 %v459
        %v597 = vunpack.c.l.b16 %v460
        %v598 = vunpack.c.h.b16 %v460
        %v599 = vunpack.c.l.b16 %v461
        %v600 = vunpack.c.h.b16 %v461
        %v601 = vunpack.c.l.b16 %v462
        %v602 = vunpack.c.h.b16 %v462
        %v603 = vunpack.c.l.b16 %v463
        %v604 = vunpack.c.h.b16 %v463
        %v605 = vunpack.c.l.b16 %v464
        %v606 = vunpack.c.h.b16 %v464
        %v607 = vunpack.c.l.b16 %v465
        %v608 = vunpack.c.h.b16 %v465
        %v609 = vpack.c.b16 %v549, %v545
        %v610 = vpack.c.b16 %v550, %v546
        %v611 = vpack.c.b16 %v551, %v547
        %v612 = vpack.c.b16 %v552, %v548
        %v613 = vpack.c.b16 %v557, %v553
        %v614 = vpack.c.b16 %v558, %v554
        %v615 = vpack.c.b16 %v559, %v555
        %v616 = vpack.c.b16 %v560, %v556
        %v617 = vpack.c.b16 %v565, %v561
        %v618 = vpack.c.b16 %v566, %v562
        %v619 = vpack.c.b16 %v567, %v563
        %v620 = vpack.c.b16 %v568, %v564
        %v621 = vpack.c.b16 %v573, %v569
        %v622 = vpack.c.b16 %v574, %v570
        %v623 = vpack.c.b16 %v575, %v571
        %v624 = vpack.c.b16 %v576, %v572
        %v625 = vpack.c.b16 %v581, %v577
        %v626 = vpack.c.b16 %v582, %v578
        %v627 = vpack.c.b16 %v583, %v579
        %v628 = vpack.c.b16 %v584, %v580
        %v629 = vpack.c.b16 %v589, %v585
        %v630 = vpack.c.b16 %v590, %v586
        %v631 = vpack.c.b16 %v591, %v587
        %v632 = vpack.c.b16 %v592, %v588
        %v633 = vpack.c.b16 %v597, %v593
        %v634 = vpack.c.b16 %v598, %v594
        %v635 = vpack.c.b16 %v599, %v595
        %v636 = vpack.c.b16 %v600, %v596
        %v637 = vpack.c.b16 %v605, %v601
        %v638 = vpack.c.b16 %v606, %v602
        %v639 = vpack.c.b16 %v607, %v603
        %v640 = vpack.c.b16 %v608, %v604
        %673 = vmatpush.bf16.xpose.msra.mxu0 %v637
        %674 = vmatpush.bf16.xpose.msra.mxu0 %v633
        %675 = vmatpush.bf16.xpose.msra.mxu0 %v629
        %676 = vmatpush.bf16.xpose.msra.mxu0 %v625
        %677 = vmatpush.bf16.xpose.msra.mxu0 %v621
        %678 = vmatpush.bf16.xpose.msra.mxu0 %v617
        %679 = vmatpush.bf16.xpose.msra.mxu0 %v613
        %680 = vmatpush.bf16.xpose.msra.mxu0 %v609
        %681 = vmatmul.bf16.gmra.mxu0 %v505
        %v682 = vpop.f32.mrf.mxu0
        %v683 = vadd.f32 0.0, %v682
        %v684 = vpop.f32.mrf.mxu0
        %685 = vdwg.mxu0
        %686 = vmatpush.bf16.xpose.msra.mxu0 %v638
        %687 = vmatpush.bf16.xpose.msra.mxu0 %v634
        %688 = vmatpush.bf16.xpose.msra.mxu0 %v630
        %689 = vmatpush.bf16.xpose.msra.mxu0 %v626
        %690 = vmatpush.bf16.xpose.msra.mxu0 %v622
        %691 = vmatpush.bf16.xpose.msra.mxu0 %v618
        %692 = vmatpush.bf16.xpose.msra.mxu0 %v614
        %693 = vmatpush.bf16.xpose.msra.mxu0 %v610
        %694 = vmatmul.bf16.gmra.mxu0 %v506
        %v695 = vpop.f32.mrf.mxu0
        %v696 = vadd.f32 %v683, %v695
        %v697 = vpop.f32.mrf.mxu0
        %698 = vdwg.mxu0
        %699 = vmatpush.bf16.xpose.msra.mxu0 %v639
        %700 = vmatpush.bf16.xpose.msra.mxu0 %v635
        %701 = vmatpush.bf16.xpose.msra.mxu0 %v631
        %702 = vmatpush.bf16.xpose.msra.mxu0 %v627
        %703 = vmatpush.bf16.xpose.msra.mxu0 %v623
        %704 = vmatpush.bf16.xpose.msra.mxu0 %v619
        %705 = vmatpush.bf16.xpose.msra.mxu0 %v615
        %706 = vmatpush.bf16.xpose.msra.mxu0 %v611
        %707 = vmatmul.bf16.gmra.mxu0 %v507
        %v708 = vpop.f32.mrf.mxu0
        %v709 = vadd.f32 %v696, %v708
        %v710 = vpop.f32.mrf.mxu0
        %711 = vdwg.mxu0
        %712 = vmatpush.bf16.xpose.msra.mxu0 %v640
        %713 = vmatpush.bf16.xpose.msra.mxu0 %v636
        %714 = vmatpush.bf16.xpose.msra.mxu0 %v632
        %715 = vmatpush.bf16.xpose.msra.mxu0 %v628
        %716 = vmatpush.bf16.xpose.msra.mxu0 %v624
        %717 = vmatpush.bf16.xpose.msra.mxu0 %v620
        %718 = vmatpush.bf16.xpose.msra.mxu0 %v616
        %719 = vmatpush.bf16.xpose.msra.mxu0 %v612
        %720 = vmatmul.bf16.gmra.mxu0 %v508
        %v721 = vpop.f32.mrf.mxu0
        %v722 = vadd.f32 %v709, %v721
        %v723 = vpop.f32.mrf.mxu0
        %724 = vdwg.mxu0
        %v725 = vmul.f32 %v722, 0.044194173
        %vm726 = vnez %v498
        %v727 = vsel %vm726, 16843009, 0
        %v728 = vunpack.c.0.s8 %v727
        %vm729 = vcmp.ne.s32.totalorder %v728, 0
        %v730 = vsel %vm729, -inf, %v725
        %s731 = smul.u32 %s39, 128
        %s732 = sshra.s32 %s731, 7
        %s733 = sand.u32 %s731, 127
        %s734 = scalar_lea.vmem %s409, %s732 [#allocation13]
        %735 = vst [vmem:[%s734] sm:$0xff] %v730
        %v736 = vld [vmem:[#allocation2] sm:$0xff]
        %737 = vmax.xlane.f32.xlu0 %v730
        %v738 = vpop.xlane.xlu0 %737
        %v739 = vmax.f32 %v736, %v738
        %v740 = vsub.f32 %v736, %v739
        %v741 = vmul.f32 %v740, 1.442695
        %v742 = vpow.pop %v741
        %744 = vset.pattern.permute.xlu0 0
        %745 = vperm.xlu0 %744, %v739
        %v746 = vpop.permute.xlu0 %745
        %v748 = vsub.f32 %v730, %v746
        %v749 = vmul.f32 %v748, 1.442695
        %v750 = vpow.pop %v749
        %v751 = vld [vmem:[#allocation3] sm:$0xff]
        %v752 = vmul.f32 %v742, %v751
        %753 = vadd.xlane.f32.xlu0 %v750
        %v754 = vpop.xlane.xlu0 %753
        %v755 = vadd.f32 %v752, %v754
        %vm756 = vcmask 7168
        %757 = vst.msk [vmem:[#allocation3] sm:$0xff] %vm756, %v755
        %v758 = vld [vmem:[#allocation4] sm:$0xff]
        %v759 = vld [vmem:[#allocation4 + $0x8] sm:$0xff]
        %v760 = vld [vmem:[#allocation4 + $0x10] sm:$0xff]
        %v761 = vld [vmem:[#allocation4 + $0x18] sm:$0xff]
        %763 = vset.pattern.permute.xlu0 0
        %764 = vperm.xlu0 %763, %v742
        %v765 = vpop.permute.xlu0 %764
        %v767 = vmul.f32 %v765, %v758
        %v768 = vmul.f32 %v765, %v759
        %v769 = vmul.f32 %v765, %v760
        %v770 = vmul.f32 %v765, %v761
        %v771 = vpack.c.bf16 %v750, %v750
        %v804 = vunpack.c.l.b16 %v466
        %v805 = vunpack.c.h.b16 %v466
        %v806 = vunpack.c.l.b16 %v467
        %v807 = vunpack.c.h.b16 %v467
        %v808 = vunpack.c.l.b16 %v468
        %v809 = vunpack.c.h.b16 %v468
        %v810 = vunpack.c.l.b16 %v469
        %v811 = vunpack.c.h.b16 %v469
        %v812 = vunpack.c.l.b16 %v470
        %v813 = vunpack.c.h.b16 %v470
        %v814 = vunpack.c.l.b16 %v471
        %v815 = vunpack.c.h.b16 %v471
        %v816 = vunpack.c.l.b16 %v472
        %v817 = vunpack.c.h.b16 %v472
        %v818 = vunpack.c.l.b16 %v473
        %v819 = vunpack.c.h.b16 %v473
        %v820 = vunpack.c.l.b16 %v474
        %v821 = vunpack.c.h.b16 %v474
        %v822 = vunpack.c.l.b16 %v475
        %v823 = vunpack.c.h.b16 %v475
        %v824 = vunpack.c.l.b16 %v476
        %v825 = vunpack.c.h.b16 %v476
        %v826 = vunpack.c.l.b16 %v477
        %v827 = vunpack.c.h.b16 %v477
        %v828 = vunpack.c.l.b16 %v478
        %v829 = vunpack.c.h.b16 %v478
        %v830 = vunpack.c.l.b16 %v479
        %v831 = vunpack.c.h.b16 %v479
        %v832 = vunpack.c.l.b16 %v480
        %v833 = vunpack.c.h.b16 %v480
        %v834 = vunpack.c.l.b16 %v481
        %v835 = vunpack.c.h.b16 %v481
        %v836 = vunpack.c.l.b16 %v482
        %v837 = vunpack.c.h.b16 %v482
        %v838 = vunpack.c.l.b16 %v483
        %v839 = vunpack.c.h.b16 %v483
        %v840 = vunpack.c.l.b16 %v484
        %v841 = vunpack.c.h.b16 %v484
        %v842 = vunpack.c.l.b16 %v485
        %v843 = vunpack.c.h.b16 %v485
        %v844 = vunpack.c.l.b16 %v486
        %v845 = vunpack.c.h.b16 %v486
        %v846 = vunpack.c.l.b16 %v487
        %v847 = vunpack.c.h.b16 %v487
        %v848 = vunpack.c.l.b16 %v488
        %v849 = vunpack.c.h.b16 %v488
        %v850 = vunpack.c.l.b16 %v489
        %v851 = vunpack.c.h.b16 %v489
        %v852 = vunpack.c.l.b16 %v490
        %v853 = vunpack.c.h.b16 %v490
        %v854 = vunpack.c.l.b16 %v491
        %v855 = vunpack.c.h.b16 %v491
        %v856 = vunpack.c.l.b16 %v492
        %v857 = vunpack.c.h.b16 %v492
        %v858 = vunpack.c.l.b16 %v493
        %v859 = vunpack.c.h.b16 %v493
        %v860 = vunpack.c.l.b16 %v494
        %v861 = vunpack.c.h.b16 %v494
        %v862 = vunpack.c.l.b16 %v495
        %v863 = vunpack.c.h.b16 %v495
        %v864 = vunpack.c.l.b16 %v496
        %v865 = vunpack.c.h.b16 %v496
        %v866 = vunpack.c.l.b16 %v497
        %v867 = vunpack.c.h.b16 %v497
        %v868 = vpack.c.b16 %v808, %v804
        %v869 = vpack.c.b16 %v809, %v805
        %v870 = vpack.c.b16 %v810, %v806
        %v871 = vpack.c.b16 %v811, %v807
        %v872 = vpack.c.b16 %v816, %v812
        %v873 = vpack.c.b16 %v817, %v813
        %v874 = vpack.c.b16 %v818, %v814
        %v875 = vpack.c.b16 %v819, %v815
        %v876 = vpack.c.b16 %v824, %v820
        %v877 = vpack.c.b16 %v825, %v821
        %v878 = vpack.c.b16 %v826, %v822
        %v879 = vpack.c.b16 %v827, %v823
        %v880 = vpack.c.b16 %v832, %v828
        %v881 = vpack.c.b16 %v833, %v829
        %v882 = vpack.c.b16 %v834, %v830
        %v883 = vpack.c.b16 %v835, %v831
        %v884 = vpack.c.b16 %v840, %v836
        %v885 = vpack.c.b16 %v841, %v837
        %v886 = vpack.c.b16 %v842, %v838
        %v887 = vpack.c.b16 %v843, %v839
        %v888 = vpack.c.b16 %v848, %v844
        %v889 = vpack.c.b16 %v849, %v845
        %v890 = vpack.c.b16 %v850, %v846
        %v891 = vpack.c.b16 %v851, %v847
        %v892 = vpack.c.b16 %v856, %v852
        %v893 = vpack.c.b16 %v857, %v853
        %v894 = vpack.c.b16 %v858, %v854
        %v895 = vpack.c.b16 %v859, %v855
        %v896 = vpack.c.b16 %v864, %v860
        %v897 = vpack.c.b16 %v865, %v861
        %v898 = vpack.c.b16 %v866, %v862
        %v899 = vpack.c.b16 %v867, %v863
        %932 = vmatpush.bf16.msra.mxu0 %v896
        %933 = vmatpush.bf16.msra.mxu0 %v892
        %934 = vmatpush.bf16.msra.mxu0 %v888
        %935 = vmatpush.bf16.msra.mxu0 %v884
        %936 = vmatpush.bf16.msra.mxu0 %v880
        %937 = vmatpush.bf16.msra.mxu0 %v876
        %938 = vmatpush.bf16.msra.mxu0 %v872
        %939 = vmatpush.bf16.msra.mxu0 %v868
        %940 = vmatmul.bf16.gmra.mxu0 %v771
        %v941 = vpop.f32.mrf.mxu0
        %v942 = vadd.f32 0.0, %v941
        %v943 = vpop.f32.mrf.mxu0
        %944 = vdwg.mxu0
        %945 = vmatpush.bf16.msra.mxu0 %v897
        %946 = vmatpush.bf16.msra.mxu0 %v893
        %947 = vmatpush.bf16.msra.mxu0 %v889
        %948 = vmatpush.bf16.msra.mxu0 %v885
        %949 = vmatpush.bf16.msra.mxu0 %v881
        %950 = vmatpush.bf16.msra.mxu0 %v877
        %951 = vmatpush.bf16.msra.mxu0 %v873
        %952 = vmatpush.bf16.msra.mxu0 %v869
        %953 = vmatmul.bf16.gmra.mxu0 %v771
        %v954 = vpop.f32.mrf.mxu0
        %v955 = vadd.f32 0.0, %v954
        %v956 = vpop.f32.mrf.mxu0
        %957 = vdwg.mxu0
        %958 = vmatpush.bf16.msra.mxu0 %v898
        %959 = vmatpush.bf16.msra.mxu0 %v894
        %960 = vmatpush.bf16.msra.mxu0 %v890
        %961 = vmatpush.bf16.msra.mxu0 %v886
        %962 = vmatpush.bf16.msra.mxu0 %v882
        %963 = vmatpush.bf16.msra.mxu0 %v878
        %964 = vmatpush.bf16.msra.mxu0 %v874
        %965 = vmatpush.bf16.msra.mxu0 %v870
        %966 = vmatmul.bf16.gmra.mxu0 %v771
        %v967 = vpop.f32.mrf.mxu0
        %v968 = vadd.f32 0.0, %v967
        %v969 = vpop.f32.mrf.mxu0
        %970 = vdwg.mxu0
        %971 = vmatpush.bf16.msra.mxu0 %v899
        %972 = vmatpush.bf16.msra.mxu0 %v895
        %973 = vmatpush.bf16.msra.mxu0 %v891
        %974 = vmatpush.bf16.msra.mxu0 %v887
        %975 = vmatpush.bf16.msra.mxu0 %v883
        %976 = vmatpush.bf16.msra.mxu0 %v879
        %977 = vmatpush.bf16.msra.mxu0 %v875
        %978 = vmatpush.bf16.msra.mxu0 %v871
        %979 = vmatmul.bf16.gmra.mxu0 %v771
        %v980 = vpop.f32.mrf.mxu0
        %v981 = vadd.f32 0.0, %v980
        %v982 = vpop.f32.mrf.mxu0
        %983 = vdwg.mxu0
        %v984 = vadd.f32 %v767, %v942
        %v985 = vadd.f32 %v768, %v955
        %v986 = vadd.f32 %v769, %v968
        %v987 = vadd.f32 %v770, %v981
        %988 = vst [vmem:[#allocation4] sm:$0xff] %v984
        %989 = vst [vmem:[#allocation4 + $0x8] sm:$0xff] %v985
        %990 = vst [vmem:[#allocation4 + $0x10] sm:$0xff] %v986
        %991 = vst [vmem:[#allocation4 + $0x18] sm:$0xff] %v987
        %992 = vst.msk [vmem:[#allocation2] sm:$0xff] %vm756, %v739
        // Predicated region
        $region57: #{tpu_custom_call.1} parent=35 // pred_check
          %p993 = pneg %p421
        $region58: #{tpu_custom_call.1} parent=35 // pred_check_branch
          %995 = sbr.rel (%p993) target = $region60
        $region59: #{tpu_custom_call.1} parent=35 // pred_region
          %v996 = vld [vmem:[#allocation3] sm:$0xff]
          %v997 = vrcp.pop %v996
          %v998 = vmul.f32 %v996, %v997
          %v999 = vsub.f32 1.0, %v998
          %v1000 = vmul.f32 %v997, %v999
          %v1001 = vadd.f32 %v997, %v1000
          %vm1002 = vweird.f32 %v996
          %vm1003 = vweird.f32 %v997
          %vm1004 = vmor %vm1002, %vm1003
          %v1005 = vsel %vm1004, %v997, %v1001
          %v1006 = vand.u32 2147483647, %v996
          %vm1007 = vcmp.eq.f32.partialorder %v1006, 8.507059e+37
          %v1008 = vand.u32 %v996, 2147483648
          %v1009 = vor.u32 1.1754944e-38, %v1008
          %v1010 = vsel %vm1007, %v1009, %v1005
          %v1011 = vld [vmem:[%s409] sm:$0xff]
          %v1012 = vld [vmem:[#allocation2] sm:$0xff]
          %1014 = vset.pattern.permute.xlu0 0
          %1015 = vperm.xlu0 %1014, %v1012
          %v1016 = vpop.permute.xlu0 %1015
          %v1018 = vsub.f32 %v1011, %v1016
          %v1019 = vmul.f32 %v1018, 1.442695
          %v1020 = vpow.pop %v1019
          %1022 = vset.pattern.permute.xlu0 0
          %1023 = vperm.xlu0 %1022, %v1010
          %v1024 = vpop.permute.xlu0 %1023
          %v1026 = vmul.f32 %v1020, %v1024
          %1027 = vst [vmem:[%s409] sm:$0xff] %v1026
          %v1028 = vld [vmem:[#allocation4] sm:$0xff]
          %v1029 = vld [vmem:[#allocation4 + $0x8] sm:$0xff]
          %v1030 = vld [vmem:[#allocation4 + $0x10] sm:$0xff]
          %v1031 = vld [vmem:[#allocation4 + $0x18] sm:$0xff]
          %v1032 = vmul.f32 %v1028, %v1024
          %v1033 = vmul.f32 %v1029, %v1024
          %v1034 = vmul.f32 %v1030, %v1024
          %v1035 = vmul.f32 %v1031, %v1024
          %1036 = vst [vmem:[%s416] sm:$0xff] %v1032
          %1037 = vst [vmem:[%s416 + $0x8] sm:$0xff] %v1033
          %1038 = vst [vmem:[%s416 + $0x10] sm:$0xff] %v1034
          %1039 = vst [vmem:[%s416 + $0x18] sm:$0xff] %v1035
        $region60: #{tpu_custom_call.1} parent=35 // pred_fallthru
          _
        %s1040 = sand.u32 %s175, 1
        %s1041 = scalar_lea.sflag [#allocation7], %s1040
        %s1042 = sand.u32 %s175, 1
        %s1043 = smul.addr %s1042, 8
        %s1044 = scalar_lea.vmem [#allocation13], %s1043
        %s1045 = sand.u32 %s203, 1
        %s1046 = scalar_lea.sflag [#allocation15], %s1045
        %s1047 = sand.u32 %s203, 1
        %s1048 = smul.addr %s1047, 32
        %s1049 = scalar_lea.vmem [#allocation14], %s1048
        // Predicated region
        $region61: #{tpu_custom_call.1} parent=35 // pred_check
          %p1050 = pneg %p185
        $region62: #{tpu_custom_call.1} parent=35 // pred_check_branch
          %1052 = sbr.rel (%p1050) target = $region64
        $region63: #{tpu_custom_call.1} parent=35 // pred_region
          %1054 = vsyncadd %s1041, 0
          %s1055 = sadd.s32 %s38, %s37
          %s1056 = smul.addr %s1055, 8
          %s1057 = scalar_lea.hbm %s4, %s1056
          %s1059 = sshll.u32 %s1044, 4
          %s1060 = int_to_ptr.vmem [resolvable:$true] %s1059
          %s1061 = sshll.u32 %s1057, 4
          %s1062 = int_to_ptr.hbm [resolvable:$true] %s1061
          %1064 = dma.vmem_to_hbm [thread:$0]  %s1060, 128, %s1062, %s1041
        $region64: #{tpu_custom_call.1} parent=35 // pred_fallthru
          _
        // Predicated region
        $region65: #{tpu_custom_call.1} parent=35 // pred_check
          %p1065 = pneg %p213
        $region66: #{tpu_custom_call.1} parent=35 // pred_check_branch
          %1067 = sbr.rel (%p1065) target = $region68
        $region67: #{tpu_custom_call.1} parent=35 // pred_region
          %1069 = vsyncadd %s1046, 0
          %s1070 = smul.addr %s38, 4
          %s1071 = smul.addr %s37, 4
          %s1072 = sadd.s32 %s1070, %s1071
          %s1073 = smul.addr %s1072, 8
          %s1074 = scalar_lea.hbm %s5, %s1073
          %s1076 = sshll.u32 %s1049, 4
          %s1077 = int_to_ptr.vmem [resolvable:$true] %s1076
          %s1078 = sshll.u32 %s1074, 4
          %s1079 = int_to_ptr.hbm [resolvable:$true] %s1078
          %1081 = dma.vmem_to_hbm [thread:$0]  %s1077, 512, %s1079, %s1046
        $region68: #{tpu_custom_call.1} parent=35 // pred_fallthru
          _
      $region36: #{tpu_custom_call.1} parent=5 // pred_fallthru
        _
      %p1082 = scmp.le.s32.totalorder 2, %s27
      // Predicated region
      $region69: #{tpu_custom_call.1} parent=5 // pred_check
        %p1083 = pneg %p1082
      $region70: #{tpu_custom_call.1} parent=5 // pred_check_branch
        %1085 = sbr.rel (%p1083) target = $region72
      $region71: #{tpu_custom_call.1} parent=5 // pred_region
        %s1086 = ssub.s32 %s27, 2
        // Predicated region
        $region73: #{tpu_custom_call.1} parent=71 // pred_check
          %p1087 = pneg %p191
        $region74: #{tpu_custom_call.1} parent=71 // pred_check_branch
          %1089 = sbr.rel (%p1087) target = $region76
        $region75: #{tpu_custom_call.1} parent=71 // pred_region
          %s1090 = sand.u32 %s176, 1
          %s1091 = scalar_lea.sflag [#allocation7], %s1090
          %s1092 = sand.u32 %s176, 1
          %s1093 = smul.addr %s1092, 8
          %s1094 = scalar_lea.vmem [#allocation13], %s1093
          %1096 = dma.done %s1091, 128
        $region76: #{tpu_custom_call.1} parent=71 // pred_fallthru
          _
        // Predicated region
        $region77: #{tpu_custom_call.1} parent=71 // pred_check
          %p1097 = pneg %p219
        $region78: #{tpu_custom_call.1} parent=71 // pred_check_branch
          %1099 = sbr.rel (%p1097) target = $region80
        $region79: #{tpu_custom_call.1} parent=71 // pred_region
          %s1100 = sand.u32 %s204, 1
          %s1101 = scalar_lea.sflag [#allocation15], %s1100
          %s1102 = sand.u32 %s204, 1
          %s1103 = smul.addr %s1102, 32
          %s1104 = scalar_lea.vmem [#allocation14], %s1103
          %1106 = dma.done %s1101, 512
        $region80: #{tpu_custom_call.1} parent=71 // pred_fallthru
          _
      $region72: #{tpu_custom_call.1} parent=5 // pred_fallthru
        _
    $region6: #{tpu_custom_call.1} parent=1 // loop_footer
      %s31 = sadd.s32 1, %s27
    $region7: #{tpu_custom_call.1} parent=1 // loop_footer_branch
      %26 = sbr.rel target = $region3
    $region8: #{tpu_custom_call.1} parent=1 // loop_exit
      _
    %1107 = vsyncpa [#allocation6], 1
    %s1108 = scalar_lea.sflag [#allocation6], 1
    %1109 = vsyncpa %s1108, 1
    %1110 = vsyncpa [#allocation9], 1
    %s1111 = scalar_lea.sflag [#allocation9], 1
    %1112 = vsyncpa %s1111, 1
    %1113 = vsyncpa [#allocation12], 1
    %s1114 = scalar_lea.sflag [#allocation12], 1
    %1115 = vsyncpa %s1114, 1
    %1116 = vsyncpa [#allocation7], 1
    %s1117 = scalar_lea.sflag [#allocation7], 1
    %1118 = vsyncpa %s1117, 1
    %1119 = vsyncpa [#allocation15], 1
    %s1120 = scalar_lea.sflag [#allocation15], 1
    %1121 = vsyncpa %s1120, 1

</llo_original>
